<compile_context>
chip_gen: v7x
topology: tpu7x:2x2x1
jax: 0.10.0
libtpu: 0.0.40
codegen_flags: <defaults>
</compile_context>

<pallas_src>
import jax
import jax.numpy as jnp
from jax.experimental import pallas as pl
from jax.experimental.pallas import tpu as pltpu

_LANES = 128
_SUBLANES = 8
# Double-buffered working-set target; conservative enough for v7x (64 MiB VMEM).
_VMEM_BUDGET_BYTES = 32 * 1024 * 1024
_VMEM_LIMIT_BYTES = 48 * 1024 * 1024


def _max_pool_kernel(x_ref, o_ref):
    # x_ref: (tb, 128, K) tile in VMEM; o_ref: (tb, 128) lane-dense output tile.
    o_ref[...] = jnp.max(x_ref[...], axis=-1)


def _round_up(x, m):
    return (x + m - 1) // m * m


def _choose_row_tile(num_rows, k, itemsize):
    """Pick the R-axis tile size for the (R, 128, K) view."""
    # VMEM bytes per R-row of the input block (K is lane-padded to 128) plus
    # the matching output row, x2 for double buffering.
    pad_k = _round_up(k, _LANES)
    per_row = 2 * (_LANES * pad_k + _LANES) * itemsize
    tb = max(1, _VMEM_BUDGET_BYTES // per_row)
    if num_rows <= _SUBLANES:
        return num_rows  # block dim == full array dim -> always a legal spec
    # Keep >= 2 grid steps when possible (v7x has 2 TensorCores).
    tb = min(tb, _round_up(pl.cdiv(num_rows, 2), _SUBLANES))
    # Output block's second-to-last dim must be a multiple of 8.
    tb = max(_SUBLANES, (tb // _SUBLANES) * _SUBLANES)
    return tb


def pooling_forward(knn_x_w):
    """Equivalent of Pooling.forward: max over the last axis.

    knn_x_w: (B, C, G, K)  ->  returns (B, C, G)
    """
    B, C, G, K = knn_x_w.shape
    M = B * C * G
    R = pl.cdiv(M, _LANES)

    x2d = knn_x_w.reshape(M, K)
    pad_rows = R * _LANES - M
    if pad_rows:
        # TODO(synk): this pad costs one extra pass over the input; it is only
        # hit when B*C*G is not a multiple of 128. Padded rows are discarded.
        x2d = jnp.pad(x2d, ((0, pad_rows), (0, 0)))
    x3d = x2d.reshape(R, _LANES, K)

    tb = _choose_row_tile(R, K, knn_x_w.dtype.itemsize)
    grid = (pl.cdiv(R, tb),)

    out = pl.pallas_call(
        _max_pool_kernel,
        out_shape=jax.ShapeDtypeStruct((R, _LANES), knn_x_w.dtype),
        grid_spec=pltpu.PrefetchScalarGridSpec(
            num_scalar_prefetch=0,
            grid=grid,
            in_specs=[pl.BlockSpec((tb, _LANES, K), lambda i: (i, 0, 0))],
            out_specs=pl.BlockSpec((tb, _LANES), lambda i: (i, 0)),
        ),
        compiler_params=pltpu.CompilerParams(
            dimension_semantics=("parallel",),
            vmem_limit_bytes=_VMEM_LIMIT_BYTES,
        ),
    )(x3d)

    return out.reshape(R * _LANES)[:M].reshape(B, C, G)


if __name__ == "__main__":
    key = jax.random.PRNGKey(0)

    # Primary check: shapes consistent with the module (B, C, G, K).
    B, C, G, K = 2, 4, 16, 8
    knn_x_w = jax.random.normal(key, (B, C, G, K), dtype=jnp.float32)
    out = pooling_forward(knn_x_w)
    jax.block_until_ready(out)
    ref = jnp.max(knn_x_w, axis=-1)
    assert out.shape == (B, C, G)
    assert jnp.array_equal(out, ref), "mismatch vs reference max-reduction"

    # Secondary check: B*C*G not a multiple of 128 and K not a power of two
    # (exercises the padded / partial-block path).
    B2, C2, G2, K2 = 2, 3, 10, 5
    x2 = jax.random.normal(jax.random.PRNGKey(1), (B2, C2, G2, K2), jnp.float32)
    out2 = pooling_forward(x2)
    jax.block_until_ready(out2)
    assert out2.shape == (B2, C2, G2)
    assert jnp.array_equal(out2, jnp.max(x2, axis=-1)), "mismatch (padded path)"

    print("KERNEL_OK")
</pallas_src>

<mosaic_0001>
module attributes {stable_mosaic.version = 11 : i64} {
  func.func @_max_pool_kernel(%arg0: i32, %arg1: memref<1x128x8xf32, #tpu.memory_space<vmem>>, %arg2: memref<1x128xf32, #tpu.memory_space<vmem>>) attributes {dimension_semantics = [#tpu.dimension_semantics<parallel>], iteration_bounds = array<i64: 1>, scalar_prefetch = 0 : i64, scratch_operands = 0 : i64, tpu.core_type = #tpu.core_type<tc>, window_params = [{transform_indices = @transform_0, window_bounds = array<i64: 1, 128, 8>}, {transform_indices = @transform_1, window_bounds = array<i64: 1, 128>}]} {
    %c0 = arith.constant 0 : index
    %c0_0 = arith.constant 0 : index
    %c0_1 = arith.constant 0 : index
    %0 = vector.load %arg1[%c0, %c0_0, %c0_1] : memref<1x128x8xf32, #tpu.memory_space<vmem>>, vector<1x128x8xf32>
    %cst = arith.constant dense<0xFF800000> : vector<1x128xf32>
    %1 = vector.multi_reduction <maximumf>, %0, %cst [2] : vector<1x128x8xf32> to vector<1x128xf32>
    %c0_2 = arith.constant 0 : index
    %c0_3 = arith.constant 0 : index
    %2 = vector.load %arg2[%c0_2, %c0_3] : memref<1x128xf32, #tpu.memory_space<vmem>>, vector<1x128xf32>
    tpu.vector_store %arg2[%c0_2, %c0_3], %1 {strides = array<i32>} : memref<1x128xf32, #tpu.memory_space<vmem>>, vector<1x128xf32>,
    return
  }
  func.func @transform_0(%arg0: i32) -> (i32, i32, i32) {
    %c0_i32 = arith.constant 0 : i32
    %c0_i32_0 = arith.constant 0 : i32
    %c0_i32_1 = arith.constant 0 : i32
    return %arg0, %c0_i32, %c0_i32_0 : i32, i32, i32
  }
  func.func @transform_1(%arg0: i32) -> (i32, i32) {
    %c0_i32 = arith.constant 0 : i32
    %c0_i32_0 = arith.constant 0 : i32
    return %arg0, %c0_i32 : i32, i32
  }
}

</mosaic_0001>

<llo_original>
// kernel: tpu_custom_call.1
$region0: #{tpu_custom_call.1}
  #allocation0 [shape = 'u32[]', space=smem, size = 0x4, offset = 0x4, fixed_abs, tag = 'smem constant byte address 0x4 - core index']
  #allocation1 [shape = 'u32[144,128]{1,0:T(1,128)}', space=vmem, size = 0x12000, scoped, tag = 'internal scratch']
  %s0 = inlined_call_operand.vmem [shape: f32[1,128,8], index: 0, kind: input, shape index: {}]
  %s1 = inlined_call_operand.hbm [shape: f32[1,128], index: 1, kind: output, shape index: {}]
  %s2 = sld [smem:[#allocation0]]
  $region14: #{tpu_custom_call.1} parent=0
    _
  %s4 = ssub.s32 1, %s2
  %s5 = scalar_select 0, %s4, %s2
  $region1: #{tpu_custom_call.1} parent=0
    #allocation2 [shape = 'u8[512]{0}', space=vmem, size = 0x400, scoped, tag = 'output window, operand 0, single buffered']
    #allocation3 [shape = 's32[1]{0}', space=sflag, size = 0x4, scoped, tag = 'scoped memory for tpu_custom_call.1']
    %6 = vsyncpa [#allocation3], 0
    // Predicated region
    $region2: #{tpu_custom_call.1} parent=1 // pred_check
      _
    $region3: #{tpu_custom_call.1} parent=1 // pred_check_branch
      %8 = sbr.rel (0) target = $region5
    $region4: #{tpu_custom_call.1} parent=1 // pred_region
      _
    $region5: #{tpu_custom_call.1} parent=1 // pred_fallthru
      _
    %v9 = vld [vmem:[%s0] sm:$0xff]
    %v10 = vld [vmem:[%s0 + $0x8] sm:$0xff]
    %v11 = vld [vmem:[%s0 + $0x10] sm:$0xff]
    %v12 = vld [vmem:[%s0 + $0x18] sm:$0xff]
    %v13 = vld [vmem:[%s0 + $0x20] sm:$0xff]
    %v14 = vld [vmem:[%s0 + $0x28] sm:$0xff]
    %v15 = vld [vmem:[%s0 + $0x30] sm:$0xff]
    %v16 = vld [vmem:[%s0 + $0x38] sm:$0xff]
    %v17 = vld [vmem:[%s0 + $0x40] sm:$0xff]
    %v18 = vld [vmem:[%s0 + $0x48] sm:$0xff]
    %v19 = vld [vmem:[%s0 + $0x50] sm:$0xff]
    %v20 = vld [vmem:[%s0 + $0x58] sm:$0xff]
    %v21 = vld [vmem:[%s0 + $0x60] sm:$0xff]
    %v22 = vld [vmem:[%s0 + $0x68] sm:$0xff]
    %v23 = vld [vmem:[%s0 + $0x70] sm:$0xff]
    %v24 = vld [vmem:[%s0 + $0x78] sm:$0xff]
    %vm25 = vcmask 64512
    %v26 = vsel %vm25, %v9, -inf
    %27 = vmax.xlane.f32.xlu0 %v26
    %v28 = vpop.xlane.xlu0 %27
    %v29 = vsel %vm25, %v10, -inf
    %30 = vmax.xlane.f32.xlu0 %v29
    %v31 = vpop.xlane.xlu0 %30
    %v32 = vsel %vm25, %v11, -inf
    %33 = vmax.xlane.f32.xlu0 %v32
    %v34 = vpop.xlane.xlu0 %33
    %v35 = vsel %vm25, %v12, -inf
    %36 = vmax.xlane.f32.xlu0 %v35
    %v37 = vpop.xlane.xlu0 %36
    %v38 = vsel %vm25, %v13, -inf
    %39 = vmax.xlane.f32.xlu0 %v38
    %v40 = vpop.xlane.xlu0 %39
    %v41 = vsel %vm25, %v14, -inf
    %42 = vmax.xlane.f32.xlu0 %v41
    %v43 = vpop.xlane.xlu0 %42
    %v44 = vsel %vm25, %v15, -inf
    %45 = vmax.xlane.f32.xlu0 %v44
    %v46 = vpop.xlane.xlu0 %45
    %v47 = vsel %vm25, %v16, -inf
    %48 = vmax.xlane.f32.xlu0 %v47
    %v49 = vpop.xlane.xlu0 %48
    %v50 = vsel %vm25, %v17, -inf
    %51 = vmax.xlane.f32.xlu0 %v50
    %v52 = vpop.xlane.xlu0 %51
    %v53 = vsel %vm25, %v18, -inf
    %54 = vmax.xlane.f32.xlu0 %v53
    %v55 = vpop.xlane.xlu0 %54
    %v56 = vsel %vm25, %v19, -inf
    %57 = vmax.xlane.f32.xlu0 %v56
    %v58 = vpop.xlane.xlu0 %57
    %v59 = vsel %vm25, %v20, -inf
    %60 = vmax.xlane.f32.xlu0 %v59
    %v61 = vpop.xlane.xlu0 %60
    %v62 = vsel %vm25, %v21, -inf
    %63 = vmax.xlane.f32.xlu0 %v62
    %v64 = vpop.xlane.xlu0 %63
    %v65 = vsel %vm25, %v22, -inf
    %66 = vmax.xlane.f32.xlu0 %v65
    %v67 = vpop.xlane.xlu0 %66
    %v68 = vsel %vm25, %v23, -inf
    %69 = vmax.xlane.f32.xlu0 %v68
    %v70 = vpop.xlane.xlu0 %69
    %v71 = vsel %vm25, %v24, -inf
    %72 = vmax.xlane.f32.xlu0 %v71
    %v73 = vpop.xlane.xlu0 %72
    %v90 = vlaneseq
    %v91 = vand.u32 %v90, 127
    %v92 = vlaneseq
    %v93 = vshrl.u32 %v92, 7
    %v94 = vsub.s32 %v91, %v93
    %v95 = vrot.slane %v28, %v94
    %v96 = vadd.s32 %v91, 4294967288
    %v97 = vlaneseq
    %v98 = vshrl.u32 %v97, 7
    %v99 = vsub.s32 %v96, %v98
    %v100 = vrot.slane %v31, %v99
    %vm101 = vcmask 130112
    %v102 = vsel %vm101, %v100, %v95
    %v103 = vadd.s32 %v91, 4294967280
    %v104 = vlaneseq
    %v105 = vshrl.u32 %v104, 7
    %v106 = vsub.s32 %v103, %v105
    %v107 = vrot.slane %v34, %v106
    %vm108 = vcmask 195712
    %v109 = vsel %vm108, %v107, %v102
    %v110 = vadd.s32 %v91, 4294967272
    %v111 = vlaneseq
    %v112 = vshrl.u32 %v111, 7
    %v113 = vsub.s32 %v110, %v112
    %v114 = vrot.slane %v37, %v113
    %vm115 = vcmask 261312
    %v116 = vsel %vm115, %v114, %v109
    %v117 = vadd.s32 %v91, 4294967264
    %v118 = vlaneseq
    %v119 = vshrl.u32 %v118, 7
    %v120 = vsub.s32 %v117, %v119
    %v121 = vrot.slane %v40, %v120
    %vm122 = vcmask 326912
    %v123 = vsel %vm122, %v121, %v116
    %v124 = vadd.s32 %v91, 4294967256
    %v125 = vlaneseq
    %v126 = vshrl.u32 %v125, 7
    %v127 = vsub.s32 %v124, %v126
    %v128 = vrot.slane %v43, %v127
    %vm129 = vcmask 392512
    %v130 = vsel %vm129, %v128, %v123
    %v131 = vadd.s32 %v91, 4294967248
    %v132 = vlaneseq
    %v133 = vshrl.u32 %v132, 7
    %v134 = vsub.s32 %v131, %v133
    %v135 = vrot.slane %v46, %v134
    %vm136 = vcmask 458112
    %v137 = vsel %vm136, %v135, %v130
    %v138 = vadd.s32 %v91, 4294967240
    %v139 = vlaneseq
    %v140 = vshrl.u32 %v139, 7
    %v141 = vsub.s32 %v138, %v140
    %v142 = vrot.slane %v49, %v141
    %vm143 = vcmask 523712
    %v144 = vsel %vm143, %v142, %v137
    %v145 = vadd.s32 %v91, 4294967232
    %v146 = vlaneseq
    %v147 = vshrl.u32 %v146, 7
    %v148 = vsub.s32 %v145, %v147
    %v149 = vrot.slane %v52, %v148
    %vm150 = vcmask 589312
    %v151 = vsel %vm150, %v149, %v144
    %v152 = vadd.s32 %v91, 4294967224
    %v153 = vlaneseq
    %v154 = vshrl.u32 %v153, 7
    %v155 = vsub.s32 %v152, %v154
    %v156 = vrot.slane %v55, %v155
    %vm157 = vcmask 654912
    %v158 = vsel %vm157, %v156, %v151
    %v159 = vadd.s32 %v91, 4294967216
    %v160 = vlaneseq
    %v161 = vshrl.u32 %v160, 7
    %v162 = vsub.s32 %v159, %v161
    %v163 = vrot.slane %v58, %v162
    %vm164 = vcmask 720512
    %v165 = vsel %vm164, %v163, %v158
    %v166 = vadd.s32 %v91, 4294967208
    %v167 = vlaneseq
    %v168 = vshrl.u32 %v167, 7
    %v169 = vsub.s32 %v166, %v168
    %v170 = vrot.slane %v61, %v169
    %vm171 = vcmask 786112
    %v172 = vsel %vm171, %v170, %v165
    %v173 = vadd.s32 %v91, 4294967200
    %v174 = vlaneseq
    %v175 = vshrl.u32 %v174, 7
    %v176 = vsub.s32 %v173, %v175
    %v177 = vrot.slane %v64, %v176
    %vm178 = vcmask 851712
    %v179 = vsel %vm178, %v177, %v172
    %v180 = vadd.s32 %v91, 4294967192
    %v181 = vlaneseq
    %v182 = vshrl.u32 %v181, 7
    %v183 = vsub.s32 %v180, %v182
    %v184 = vrot.slane %v67, %v183
    %vm185 = vcmask 917312
    %v186 = vsel %vm185, %v184, %v179
    %v187 = vadd.s32 %v91, 4294967184
    %v188 = vlaneseq
    %v189 = vshrl.u32 %v188, 7
    %v190 = vsub.s32 %v187, %v189
    %v191 = vrot.slane %v70, %v190
    %vm192 = vcmask 982912
    %v193 = vsel %vm192, %v191, %v186
    %v194 = vadd.s32 %v91, 4294967176
    %v195 = vlaneseq
    %v196 = vshrl.u32 %v195, 7
    %v197 = vsub.s32 %v194, %v196
    %v198 = vrot.slane %v73, %v197
    %vm199 = vcmask 1048512
    %v200 = vsel %vm199, %v198, %v193
    %202 = vst [vmem:[#allocation2] sm:$0x1] %v200
    // Predicated region
    $region6: #{tpu_custom_call.1} parent=1 // pred_check
      _
    $region7: #{tpu_custom_call.1} parent=1 // pred_check_branch
      %204 = sbr.rel (0) target = $region9
    $region8: #{tpu_custom_call.1} parent=1 // pred_region
      %s206 = ssub.s32 16, 16
      %207 = vsyncadd [#allocation3], %s206
      %s209 = sshll.u32 [#allocation2], 4
      %s210 = int_to_ptr.vmem [resolvable:$true] %s209
      %212 = dma.vmem_to_hbm [thread:$0]  %s210, 16, %s1, [#allocation3]
    $region9: #{tpu_custom_call.1} parent=1 // pred_fallthru
      _
    // Predicated region
    $region10: #{tpu_custom_call.1} parent=1 // pred_check
      _
    $region11: #{tpu_custom_call.1} parent=1 // pred_check_branch
      %214 = sbr.rel (0) target = $region13
    $region12: #{tpu_custom_call.1} parent=1 // pred_region
      %215 = dma.done [#allocation3], 16
    $region13: #{tpu_custom_call.1} parent=1 // pred_fallthru
      _
    %216 = vsyncpa [#allocation3], 1

</llo_original>
